<compile_context>
chip_gen: v7x
topology: tpu7x:2x2x1
jax: 0.10.0
libtpu: 0.0.40
codegen_flags: <defaults>
</compile_context>

<pallas_src>
import jax
import jax.numpy as jnp
from jax import lax
from jax.experimental import pallas as pl
from jax.experimental.pallas import tpu as pltpu

EPS = 1e-5                      # PyTorch nn.LayerNorm default
_VMEM_LIMIT = 64 * 1024 * 1024  # raise scoped VMEM so large row tiles fit


def _round_up(x, m):
    return (x + m - 1) // m * m


def _pick_row_tile(rows, max_tile=512):
    """Row tile (multiple of 8, up to max_tile) and padded row count."""
    tm = min(max_tile, _round_up(rows, 8))
    return tm, _round_up(rows, tm)


def _pick_col_tile(n, target=512, unit=128):
    """Lane-axis tile: full extent if small/odd, else a 128-multiple divisor."""
    if n <= target or n % unit != 0:
        return n
    t = (target // unit) * unit
    while n % t != 0:
        t -= unit
    return max(t, unit)


def _ln_rows_f32(x):
    """One-pass LayerNorm stats over the last axis. x is f32 (tm, dim)."""
    inv_dim = 1.0 / x.shape[-1]
    mean = jnp.sum(x, axis=-1, keepdims=True) * inv_dim
    ex2 = jnp.sum(x * x, axis=-1, keepdims=True) * inv_dim
    var = jnp.maximum(ex2 - mean * mean, 0.0)        # biased var, like torch
    inv = lax.rsqrt(var + EPS)
    return (x - mean) * inv


# ---------------------------------------------------------------------------
# Fused kernel: LayerNorm(row tile) immediately fed to the Linear matmul.
# ---------------------------------------------------------------------------
def _prenorm_linear_kernel(x_ref, g_ref, b_ref, w_ref, bias_ref, o_ref):
    x = x_ref[...].astype(jnp.float32)               # (tm, dim)
    y = _ln_rows_f32(x)
    y = y * g_ref[...].astype(jnp.float32) + b_ref[...].astype(jnp.float32)
    acc = jnp.dot(y.astype(w_ref.dtype), w_ref[...],
                  preferred_element_type=jnp.float32)  # (tm, tn) on the MXU
    o_ref[...] = (acc + bias_ref[...].astype(jnp.float32)).astype(o_ref.dtype)


def prenorm_linear_pallas(x, gamma, beta, w, bias, *, max_row_tile=512):
    """Fused fn(LayerNorm(x)) for fn = Linear(dim, dim_out). x: (..., dim)."""
    orig_shape = x.shape
    dim = orig_shape[-1]
    dim_out = w.shape[1]
    x2d = x.reshape(-1, dim)
    rows = x2d.shape[0]

    tm, rows_p = _pick_row_tile(rows, max_row_tile)
    tn = _pick_col_tile(dim_out)
    if rows_p != rows:
        x2d = jnp.pad(x2d, ((0, rows_p - rows), (0, 0)))

    g = gamma.reshape(1, dim)
    b = beta.reshape(1, dim)
    bias2 = bias.reshape(1, dim_out)

    out = pl.pallas_call(
        _prenorm_linear_kernel,
        out_shape=jax.ShapeDtypeStruct((rows_p, dim_out), x.dtype),
        grid_spec=pltpu.PrefetchScalarGridSpec(
            num_scalar_prefetch=0,
            grid=(rows_p // tm, dim_out // tn),
            in_specs=[
                pl.BlockSpec((tm, dim), lambda i, j: (i, 0)),    # x rows
                pl.BlockSpec((1, dim), lambda i, j: (0, 0)),     # gamma
                pl.BlockSpec((1, dim), lambda i, j: (0, 0)),     # beta
                pl.BlockSpec((dim, tn), lambda i, j: (0, j)),    # W column tile
                pl.BlockSpec((1, tn), lambda i, j: (0, j)),      # bias tile
            ],
            out_specs=pl.BlockSpec((tm, tn), lambda i, j: (i, j)),
        ),
        compiler_params=pltpu.CompilerParams(
            dimension_semantics=("parallel", "parallel"),
            vmem_limit_bytes=_VMEM_LIMIT),
    )(x2d, g, b, w, bias2)

    if rows_p != rows:
        out = out[:rows]
    return out.reshape(*orig_shape[:-1], dim_out)


# ---------------------------------------------------------------------------
# Standalone LayerNorm kernel (for PreNorm wrapping an arbitrary fn).
# ---------------------------------------------------------------------------
def _layernorm_kernel(x_ref, g_ref, b_ref, o_ref):
    x = x_ref[...].astype(jnp.float32)
    y = _ln_rows_f32(x)
    y = y * g_ref[...].astype(jnp.float32) + b_ref[...].astype(jnp.float32)
    o_ref[...] = y.astype(o_ref.dtype)


def layernorm_pallas(x2d, gamma, beta, *, max_row_tile=512):
    rows, dim = x2d.shape
    tm, rows_p = _pick_row_tile(rows, max_row_tile)
    xp = jnp.pad(x2d, ((0, rows_p - rows), (0, 0))) if rows_p != rows else x2d
    g = gamma.reshape(1, dim)
    b = beta.reshape(1, dim)
    out = pl.pallas_call(
        _layernorm_kernel,
        out_shape=jax.ShapeDtypeStruct((rows_p, dim), x2d.dtype),
        grid_spec=pltpu.PrefetchScalarGridSpec(
            num_scalar_prefetch=0,
            grid=(rows_p // tm,),
            in_specs=[
                pl.BlockSpec((tm, dim), lambda i: (i, 0)),
                pl.BlockSpec((1, dim), lambda i: (0, 0)),
                pl.BlockSpec((1, dim), lambda i: (0, 0)),
            ],
            out_specs=pl.BlockSpec((tm, dim), lambda i: (i, 0)),
        ),
        compiler_params=pltpu.CompilerParams(
            dimension_semantics=("parallel",),
            vmem_limit_bytes=_VMEM_LIMIT),
    )(xp, g, b)
    return out[:rows] if rows_p != rows else out


def prenorm(x, gamma, beta, fn, **kwargs):
    """General PreNorm: fn(LayerNorm(x), **kwargs) for any fn."""
    shape = x.shape
    y2d = layernorm_pallas(x.reshape(-1, shape[-1]), gamma, beta)
    return fn(y2d.reshape(shape), **kwargs)


if __name__ == "__main__":
    key = jax.random.PRNGKey(0)
    B, S, dim = 2, 8, 32

    kx, kw, kb, kg, kbe = jax.random.split(key, 5)
    x = jax.random.normal(kx, (B, S, dim), dtype=jnp.float32)

    # LayerNorm affine params (non-trivial to exercise the full path).
    gamma = 1.0 + 0.1 * jax.random.normal(kg, (dim,), dtype=jnp.float32)
    beta = 0.1 * jax.random.normal(kbe, (dim,), dtype=jnp.float32)

    # Example wrapped fn: Linear(dim, dim).
    w = jax.random.normal(kw, (dim, dim), dtype=jnp.float32) * 0.02
    b = jax.random.normal(kb, (dim,), dtype=jnp.float32) * 0.02

    # Fast fused path.
    out_fused = prenorm_linear_pallas(x, gamma, beta, w, b)
    # Generic path (LN kernel + arbitrary fn).
    out_generic = prenorm(x, gamma, beta, lambda y: y @ w + b)
    jax.block_until_ready((out_fused, out_generic))

    # Reference in plain JAX (PyTorch LayerNorm semantics).
    mu = jnp.mean(x, axis=-1, keepdims=True)
    var = jnp.mean((x - mu) ** 2, axis=-1, keepdims=True)
    ln_ref = (x - mu) / jnp.sqrt(var + EPS) * gamma + beta
    ref = ln_ref @ w + b

    assert jnp.allclose(out_fused, ref, atol=1e-4, rtol=1e-4), "fused mismatch"
    assert jnp.allclose(out_generic, ref, atol=1e-4, rtol=1e-4), "generic mismatch"

    print("KERNEL_OK")
</pallas_src>

<mosaic_0001>
module attributes {stable_mosaic.version = 11 : i64} {
  func.func @_prenorm_linear_kernel(%arg0: i32, %arg1: i32, %arg2: memref<16x32xf32, #tpu.memory_space<vmem>>, %arg3: memref<1x32xf32, #tpu.memory_space<vmem>>, %arg4: memref<1x32xf32, #tpu.memory_space<vmem>>, %arg5: memref<32x32xf32, #tpu.memory_space<vmem>>, %arg6: memref<1x32xf32, #tpu.memory_space<vmem>>, %arg7: memref<16x32xf32, #tpu.memory_space<vmem>>) attributes {dimension_semantics = [#tpu.dimension_semantics<parallel>, #tpu.dimension_semantics<parallel>], iteration_bounds = array<i64: 1, 1>, scalar_prefetch = 0 : i64, scratch_operands = 0 : i64, tpu.core_type = #tpu.core_type<tc>, window_params = [{transform_indices = @transform_0, window_bounds = array<i64: 16, 32>}, {pipeline_mode = #tpu.pipeline_mode<synchronous>, transform_indices = @transform_1, window_bounds = array<i64: 1, 32>}, {pipeline_mode = #tpu.pipeline_mode<synchronous>, transform_indices = @transform_2, window_bounds = array<i64: 1, 32>}, {transform_indices = @transform_3, window_bounds = array<i64: 32, 32>}, {transform_indices = @transform_4, window_bounds = array<i64: 1, 32>}, {transform_indices = @transform_5, window_bounds = array<i64: 16, 32>}]} {
    %c0 = arith.constant 0 : index
    %c0_0 = arith.constant 0 : index
    %0 = vector.load %arg2[%c0, %c0_0] : memref<16x32xf32, #tpu.memory_space<vmem>>, vector<16x32xf32>
    %cst = arith.constant dense<0.000000e+00> : vector<16xf32>
    %1 = vector.multi_reduction <add>, %0, %cst [1] : vector<16x32xf32> to vector<16xf32>
    %2 = vector.shape_cast %1 : vector<16xf32> to vector<16x1xf32>
    %cst_1 = arith.constant 3.125000e-02 : f32
    %3 = vector.broadcast %cst_1 : f32 to vector<16x1xf32>
    %4 = arith.mulf %2, %3 : vector<16x1xf32>
    %5 = arith.mulf %0, %0 : vector<16x32xf32>
    %cst_2 = arith.constant dense<0.000000e+00> : vector<16xf32>
    %6 = vector.multi_reduction <add>, %5, %cst_2 [1] : vector<16x32xf32> to vector<16xf32>
    %7 = vector.shape_cast %6 : vector<16xf32> to vector<16x1xf32>
    %cst_3 = arith.constant 3.125000e-02 : f32
    %8 = vector.broadcast %cst_3 : f32 to vector<16x1xf32>
    %9 = arith.mulf %7, %8 : vector<16x1xf32>
    %10 = arith.mulf %4, %4 : vector<16x1xf32>
    %11 = arith.subf %9, %10 : vector<16x1xf32>
    %cst_4 = arith.constant 0.000000e+00 : f32
    %12 = vector.broadcast %cst_4 : f32 to vector<16x1xf32>
    %13 = arith.maximumf %11, %12 : vector<16x1xf32>
    %cst_5 = arith.constant 9.99999974E-6 : f32
    %14 = vector.broadcast %cst_5 : f32 to vector<16x1xf32>
    %15 = arith.addf %13, %14 : vector<16x1xf32>
    %16 = math.rsqrt %15 : vector<16x1xf32>
    %17 = vector.broadcast %4 : vector<16x1xf32> to vector<16x32xf32>
    %18 = arith.subf %0, %17 : vector<16x32xf32>
    %19 = vector.broadcast %16 : vector<16x1xf32> to vector<16x32xf32>
    %20 = arith.mulf %18, %19 : vector<16x32xf32>
    %c0_6 = arith.constant 0 : index
    %c0_7 = arith.constant 0 : index
    %21 = vector.load %arg3[%c0_6, %c0_7] : memref<1x32xf32, #tpu.memory_space<vmem>>, vector<1x32xf32>
    %22 = vector.broadcast %21 : vector<1x32xf32> to vector<16x32xf32>
    %23 = arith.mulf %20, %22 : vector<16x32xf32>
    %c0_8 = arith.constant 0 : index
    %c0_9 = arith.constant 0 : index
    %24 = vector.load %arg4[%c0_8, %c0_9] : memref<1x32xf32, #tpu.memory_space<vmem>>, vector<1x32xf32>
    %25 = vector.broadcast %24 : vector<1x32xf32> to vector<16x32xf32>
    %26 = arith.addf %23, %25 : vector<16x32xf32>
    %c0_10 = arith.constant 0 : index
    %c0_11 = arith.constant 0 : index
    %27 = vector.load %arg5[%c0_10, %c0_11] : memref<32x32xf32, #tpu.memory_space<vmem>>, vector<32x32xf32>
    %cst_12 = arith.constant dense<0.000000e+00> : vector<16x32xf32>
    %28 = tpu.matmul %26, %27, %cst_12 {dimension_numbers = #tpu.dot_dimension_numbers<[1], [0], [0], [1], [0, 0, 1, 1], [], []>} : vector<16x32xf32>, vector<32x32xf32>, vector<16x32xf32> -> vector<16x32xf32>
    %c0_13 = arith.constant 0 : index
    %c0_14 = arith.constant 0 : index
    %29 = vector.load %arg6[%c0_13, %c0_14] : memref<1x32xf32, #tpu.memory_space<vmem>>, vector<1x32xf32>
    %30 = vector.broadcast %29 : vector<1x32xf32> to vector<16x32xf32>
    %31 = arith.addf %28, %30 : vector<16x32xf32>
    %c0_15 = arith.constant 0 : index
    %c0_16 = arith.constant 0 : index
    %32 = vector.load %arg7[%c0_15, %c0_16] : memref<16x32xf32, #tpu.memory_space<vmem>>, vector<16x32xf32>
    tpu.vector_store %arg7[%c0_15, %c0_16], %31 {strides = array<i32>} : memref<16x32xf32, #tpu.memory_space<vmem>>, vector<16x32xf32>,
    return
  }
  func.func @transform_0(%arg0: i32, %arg1: i32) -> (i32, i32) {
    %c0_i32 = arith.constant 0 : i32
    %c0_i32_0 = arith.constant 0 : i32
    return %arg0, %c0_i32 : i32, i32
  }
  func.func @transform_1(%arg0: i32, %arg1: i32) -> (i32, i32) {
    %c0_i32 = arith.constant 0 : i32
    %c0_i32_0 = arith.constant 0 : i32
    %c0_i32_1 = arith.constant 0 : i32
    return %c0_i32, %c0_i32_0 : i32, i32
  }
  func.func @transform_2(%arg0: i32, %arg1: i32) -> (i32, i32) {
    %c0_i32 = arith.constant 0 : i32
    %c0_i32_0 = arith.constant 0 : i32
    %c0_i32_1 = arith.constant 0 : i32
    return %c0_i32, %c0_i32_0 : i32, i32
  }
  func.func @transform_3(%arg0: i32, %arg1: i32) -> (i32, i32) {
    %c0_i32 = arith.constant 0 : i32
    %c0_i32_0 = arith.constant 0 : i32
    return %c0_i32, %arg1 : i32, i32
  }
  func.func @transform_4(%arg0: i32, %arg1: i32) -> (i32, i32) {
    %c0_i32 = arith.constant 0 : i32
    %c0_i32_0 = arith.constant 0 : i32
    return %c0_i32, %arg1 : i32, i32
  }
  func.func @transform_5(%arg0: i32, %arg1: i32) -> (i32, i32) {
    %c0_i32 = arith.constant 0 : i32
    return %arg0, %arg1 : i32, i32
  }
}

</mosaic_0001>

<llo_original>
// kernel: tpu_custom_call.1
$region0: #{tpu_custom_call.1}
  #allocation0 [shape = 'u32[]', space=smem, size = 0x4, offset = 0x4, fixed_abs, tag = 'smem constant byte address 0x4 - core index']
  #allocation1 [shape = 'u32[144,128]{1,0:T(1,128)}', space=vmem, size = 0x12000, scoped, tag = 'internal scratch']
  %s0 = inlined_call_operand.hbm [shape: f32[16,32], index: 0, kind: input, shape index: {}]
  %s1 = inlined_call_operand.hbm [shape: f32[1,32], index: 1, kind: input, shape index: {}]
  %s2 = inlined_call_operand.hbm [shape: f32[1,32], index: 2, kind: input, shape index: {}]
  %s3 = inlined_call_operand.hbm [shape: f32[32,32], index: 3, kind: input, shape index: {}]
  %s4 = inlined_call_operand.hbm [shape: f32[1,32], index: 4, kind: input, shape index: {}]
  %s5 = inlined_call_operand.hbm [shape: f32[16,32], index: 5, kind: output, shape index: {}]
  %s6 = sld [smem:[#allocation0]]
  $region50: #{tpu_custom_call.1} parent=0
    _
  %s8 = ssub.s32 1, %s6
  %s9 = scalar_select 0, %s8, %s6
  $region1: #{tpu_custom_call.1} parent=0
    #allocation2 [shape = 'u8[8192]{0}', space=vmem, size = 0x2000, scoped, tag = 'input window, operand 0, single buffered']
    #allocation3 [shape = 's32[1]{0}', space=sflag, size = 0x4, scoped, tag = 'scoped memory for tpu_custom_call.1']
    #allocation4 [shape = 's32[1]{0}', space=sflag, size = 0x4, scoped, tag = 'scoped memory for tpu_custom_call.1']
    #allocation5 [shape = 'u8[512]{0}', space=vmem, size = 0x400, scoped, tag = 'input window, operand 1, single buffered']
    #allocation6 [shape = 's32[1]{0}', space=sflag, size = 0x4, scoped, tag = 'scoped memory for tpu_custom_call.1']
    #allocation7 [shape = 'u8[512]{0}', space=vmem, size = 0x400, scoped, tag = 'input window, operand 2, single buffered']
    #allocation8 [shape = 'u8[16384]{0}', space=vmem, size = 0x4000, scoped, tag = 'input window, operand 3, single buffered']
    #allocation9 [shape = 's32[1]{0}', space=sflag, size = 0x4, scoped, tag = 'scoped memory for tpu_custom_call.1']
    #allocation10 [shape = 'u8[512]{0}', space=vmem, size = 0x400, scoped, tag = 'input window, operand 4, single buffered']
    #allocation11 [shape = 'u8[8192]{0}', space=vmem, size = 0x2000, scoped, tag = 'output window, operand 0, single buffered']
    %10 = vsyncpa [#allocation3], 0
    %11 = vsyncpa [#allocation6], 0
    %12 = vsyncpa [#allocation9], 0
    %13 = vsyncpa [#allocation4], 0
    // Predicated region
    $region2: #{tpu_custom_call.1} parent=1 // pred_check
      _
    $region3: #{tpu_custom_call.1} parent=1 // pred_check_branch
      %15 = sbr.rel (0) target = $region5
    $region4: #{tpu_custom_call.1} parent=1 // pred_region
      %s17 = ssub.s32 256, 256
      %18 = vsyncadd [#allocation3], %s17
      %s19 = sshll.u32 [#allocation2], 4
      %s20 = int_to_ptr.vmem [resolvable:$true] %s19
      %25 = dma.hbm_to_vmem [thread:$0]  %s0, 256, %s20, [#allocation3], 128, 128, 8
    $region5: #{tpu_custom_call.1} parent=1 // pred_fallthru
      _
    // Predicated region
    $region6: #{tpu_custom_call.1} parent=1 // pred_check
      _
    $region7: #{tpu_custom_call.1} parent=1 // pred_check_branch
      %27 = sbr.rel (0) target = $region9
    $region8: #{tpu_custom_call.1} parent=1 // pred_region
      %s29 = ssub.s32 16, 16
      %30 = vsyncadd [#allocation6], %s29
      %s32 = sshll.u32 [#allocation5], 4
      %s33 = int_to_ptr.vmem [resolvable:$true] %s32
      %35 = dma.hbm_to_vmem [thread:$0]  %s1, 16, %s33, [#allocation6]
    $region9: #{tpu_custom_call.1} parent=1 // pred_fallthru
      _
    // Predicated region
    $region10: #{tpu_custom_call.1} parent=1 // pred_check
      _
    $region11: #{tpu_custom_call.1} parent=1 // pred_check_branch
      %37 = sbr.rel (0) target = $region13
    $region12: #{tpu_custom_call.1} parent=1 // pred_region
      %s39 = ssub.s32 16, 16
      %40 = vsyncadd [#allocation6], %s39
      %s42 = sshll.u32 [#allocation7], 4
      %s43 = int_to_ptr.vmem [resolvable:$true] %s42
      %45 = dma.hbm_to_vmem [thread:$0]  %s2, 16, %s43, [#allocation6]
    $region13: #{tpu_custom_call.1} parent=1 // pred_fallthru
      _
    // Predicated region
    $region14: #{tpu_custom_call.1} parent=1 // pred_check
      _
    $region15: #{tpu_custom_call.1} parent=1 // pred_check_branch
      %47 = sbr.rel (0) target = $region17
    $region16: #{tpu_custom_call.1} parent=1 // pred_region
      %s49 = ssub.s32 512, 512
      %50 = vsyncadd [#allocation9], %s49
      %s51 = sshll.u32 [#allocation8], 4
      %s52 = int_to_ptr.vmem [resolvable:$true] %s51
      %57 = dma.hbm_to_vmem [thread:$0]  %s3, 512, %s52, [#allocation9], 128, 128, 8
    $region17: #{tpu_custom_call.1} parent=1 // pred_fallthru
      _
    // Predicated region
    $region18: #{tpu_custom_call.1} parent=1 // pred_check
      _
    $region19: #{tpu_custom_call.1} parent=1 // pred_check_branch
      %59 = sbr.rel (0) target = $region21
    $region20: #{tpu_custom_call.1} parent=1 // pred_region
      %s61 = ssub.s32 16, 16
      %62 = vsyncadd [#allocation9], %s61
      %s64 = sshll.u32 [#allocation10], 4
      %s65 = int_to_ptr.vmem [resolvable:$true] %s64
      %67 = dma.hbm_to_vmem [thread:$0]  %s4, 16, %s65, [#allocation9]
    $region21: #{tpu_custom_call.1} parent=1 // pred_fallthru
      _
    // Predicated region
    $region22: #{tpu_custom_call.1} parent=1 // pred_check
      _
    $region23: #{tpu_custom_call.1} parent=1 // pred_check_branch
      %69 = sbr.rel (0) target = $region25
    $region24: #{tpu_custom_call.1} parent=1 // pred_region
      %70 = dma.done [#allocation3], 256
    $region25: #{tpu_custom_call.1} parent=1 // pred_fallthru
      _
    // Predicated region
    $region26: #{tpu_custom_call.1} parent=1 // pred_check
      _
    $region27: #{tpu_custom_call.1} parent=1 // pred_check_branch
      %72 = sbr.rel (0) target = $region29
    $region28: #{tpu_custom_call.1} parent=1 // pred_region
      %73 = dma.done [#allocation6], 16
    $region29: #{tpu_custom_call.1} parent=1 // pred_fallthru
      _
    // Predicated region
    $region30: #{tpu_custom_call.1} parent=1 // pred_check
      _
    $region31: #{tpu_custom_call.1} parent=1 // pred_check_branch
      %75 = sbr.rel (0) target = $region33
    $region32: #{tpu_custom_call.1} parent=1 // pred_region
      %76 = dma.done [#allocation6], 16
    $region33: #{tpu_custom_call.1} parent=1 // pred_fallthru
      _
    // Predicated region
    $region34: #{tpu_custom_call.1} parent=1 // pred_check
      _
    $region35: #{tpu_custom_call.1} parent=1 // pred_check_branch
      %78 = sbr.rel (0) target = $region37
    $region36: #{tpu_custom_call.1} parent=1 // pred_region
      %79 = dma.done [#allocation9], 512
    $region37: #{tpu_custom_call.1} parent=1 // pred_fallthru
      _
    // Predicated region
    $region38: #{tpu_custom_call.1} parent=1 // pred_check
      _
    $region39: #{tpu_custom_call.1} parent=1 // pred_check_branch
      %81 = sbr.rel (0) target = $region41
    $region40: #{tpu_custom_call.1} parent=1 // pred_region
      %82 = dma.done [#allocation9], 16
    $region41: #{tpu_custom_call.1} parent=1 // pred_fallthru
      _
    %v83 = vld [vmem:[#allocation2] sm:$0xff]
    %v84 = vld [vmem:[#allocation2 + $0x8] sm:$0xff]
    %vm85 = vcmask 261120
    %v86 = vsel %vm85, %v83, 0.0
    %87 = vadd.xlane.f32.xlu0 %v86
    %v88 = vpop.xlane.xlu0 %87
    %v89 = vsel %vm85, %v84, 0.0
    %90 = vadd.xlane.f32.xlu0 %v89
    %v91 = vpop.xlane.xlu0 %90
    %v92 = vmul.f32 %v88, 0.03125
    %v93 = vmul.f32 %v91, 0.03125
    %v94 = vmul.f32 %v83, %v83
    %v95 = vmul.f32 %v84, %v84
    %v96 = vsel %vm85, %v94, 0.0
    %97 = vadd.xlane.f32.xlu0 %v96
    %v98 = vpop.xlane.xlu0 %97
    %v99 = vsel %vm85, %v95, 0.0
    %100 = vadd.xlane.f32.xlu0 %v99
    %v101 = vpop.xlane.xlu0 %100
    %v102 = vmul.f32 %v98, 0.03125
    %v103 = vmul.f32 %v101, 0.03125
    %v104 = vmul.f32 %v92, %v92
    %v105 = vmul.f32 %v93, %v93
    %v106 = vsub.f32 %v102, %v104
    %v107 = vsub.f32 %v103, %v105
    %v108 = vmax.f32 %v106, 0.0
    %v109 = vmax.f32 %v107, 0.0
    %v110 = vadd.f32 %v108, 1e-05
    %v111 = vadd.f32 %v109, 1e-05
    %v112 = vrsqrt.pop %v110
    %v113 = vrsqrt.pop %v111
    %v114 = vsub.f32 %v83, %v92
    %v115 = vsub.f32 %v84, %v93
    %v116 = vmul.f32 %v114, %v112
    %v117 = vmul.f32 %v115, %v113
    %v118 = vld [vmem:[#allocation5] sm:$0x1]
    %v120 = vlaneseq
    %v121 = vshrl.u32 %v120, 7
    %v122 = vsub.s32 0, %v121
    %v123 = vrot.slane %v118, %v122
    %v125 = vmul.f32 %v116, %v123
    %v126 = vmul.f32 %v117, %v123
    %v127 = vld [vmem:[#allocation7] sm:$0x1]
    %v129 = vlaneseq
    %v130 = vshrl.u32 %v129, 7
    %v131 = vsub.s32 0, %v130
    %v132 = vrot.slane %v127, %v131
    %v134 = vadd.f32 %v125, %v132
    %v135 = vadd.f32 %v126, %v132
    %v136 = vld [vmem:[#allocation8] sm:$0xff]
    %v137 = vld [vmem:[#allocation8 + $0x8] sm:$0xff]
    %v138 = vld [vmem:[#allocation8 + $0x10] sm:$0xff]
    %v139 = vld [vmem:[#allocation8 + $0x18] sm:$0xff]
    %v140 = vld [vmem:[#allocation10] sm:$0x1]
    %v142 = vlaneseq
    %v143 = vshrl.u32 %v142, 7
    %v144 = vsub.s32 0, %v143
    %v145 = vrot.slane %v140, %v144
    %v148 = vsel %vm85, %v134, 0
    %v151 = vsel %vm85, %v135, 0
    %153 = vmatprep.subr.mxu0 0.0
    %154 = vmatpush1.msra.mxu0 %v136
    %155 = vmatprep.subr.mxu0 0.0
    %156 = vmatpush1.msra.mxu0 %v137
    %157 = vmatprep.subr.mxu0 0.0
    %158 = vmatpush1.msra.mxu0 %v138
    %159 = vmatprep.subr.mxu0 0.0
    %160 = vmatpush1.msra.mxu0 %v139
    %161 = vmatprep.subr.mxu0 0.0
    %162 = vmatpush1.msra.mxu0 0.0
    %163 = vmatprep.subr.mxu0 0.0
    %164 = vmatpush1.msra.mxu0 0.0
    %165 = vmatprep.subr.mxu0 0.0
    %166 = vmatpush1.msra.mxu0 0.0
    %167 = vmatprep.subr.mxu0 0.0
    %168 = vmatpush1.msra.mxu0 0.0
    %169 = vmatprep.subr.mxu0 0.0
    %170 = vmatpush1.msra.mxu0 0.0
    %171 = vmatprep.subr.mxu0 0.0
    %172 = vmatpush1.msra.mxu0 0.0
    %173 = vmatprep.subr.mxu0 0.0
    %174 = vmatpush1.msra.mxu0 0.0
    %175 = vmatprep.subr.mxu0 0.0
    %176 = vmatpush1.msra.mxu0 0.0
    %177 = vmatprep.subr.mxu0 0.0
    %178 = vmatpush1.msra.mxu0 0.0
    %179 = vmatprep.subr.mxu0 0.0
    %180 = vmatpush1.msra.mxu0 0.0
    %181 = vmatprep.subr.mxu0 0.0
    %182 = vmatpush1.msra.mxu0 0.0
    %183 = vmatprep.subr.mxu0 0.0
    %184 = vmatpush1.msra.mxu0 0.0
    %185 = vmatprep.subr.mxu0 0.0
    %186 = vmatpush1.msra.mxu0 0.0
    %187 = vmatprep.subr.mxu0 0.0
    %188 = vmatpush1.msra.mxu0 0.0
    %189 = vmatprep.subr.mxu0 0.0
    %190 = vmatpush1.msra.mxu0 0.0
    %191 = vmatprep.subr.mxu0 0.0
    %192 = vmatpush1.msra.mxu0 0.0
    %193 = vmatprep.subr.mxu0 0.0
    %194 = vmatpush1.msra.mxu0 0.0
    %195 = vmatprep.subr.mxu0 0.0
    %196 = vmatpush1.msra.mxu0 0.0
    %197 = vmatprep.subr.mxu0 0.0
    %198 = vmatpush1.msra.mxu0 0.0
    %199 = vmatprep.subr.mxu0 0.0
    %200 = vmatpush1.msra.mxu0 0.0
    %201 = vmatprep.subr.mxu0 0.0
    %202 = vmatpush1.msra.mxu0 0.0
    %203 = vmatprep.subr.mxu0 0.0
    %204 = vmatpush1.msra.mxu0 0.0
    %205 = vmatprep.subr.mxu0 0.0
    %206 = vmatpush1.msra.mxu0 0.0
    %207 = vmatprep.subr.mxu0 0.0
    %208 = vmatpush1.msra.mxu0 0.0
    %209 = vmatprep.subr.mxu0 0.0
    %210 = vmatpush1.msra.mxu0 0.0
    %211 = vmatprep.subr.mxu0 0.0
    %212 = vmatpush1.msra.mxu0 0.0
    %213 = vmatprep.subr.mxu0 0.0
    %214 = vmatpush1.msra.mxu0 0.0
    %215 = vmatprep.subr.mxu0 0.0
    %216 = vmatpush1.msra.mxu0 0.0
    %217 = vmatprep.mubr.f32.mxu0 0.0
    %218 = vmatmul.mubr.f32.gmra.mrb[0].mxu0 %v148
    %v219 = vpop.f32.mrb[0].mxu0
    %v220 = vadd.f32 %v145, %v219
    %v221 = vpop.f32.mrb[0].mxu0
    %222 = vmatprep.mubr.f32.mxu0 0.0
    %223 = vmatmul.mubr.f32.gmra.mrb[0].mxu0 %v151
    %v224 = vpop.f32.mrb[0].mxu0
    %v225 = vadd.f32 %v145, %v224
    %v226 = vpop.f32.mrb[0].mxu0
    %227 = vdwg.mxu0
    %228 = vst.msk [vmem:[#allocation11] sm:$0xff] %vm85, %v220
    %229 = vst.msk [vmem:[#allocation11 + $0x8] sm:$0xff] %vm85, %v225
    // Predicated region
    $region42: #{tpu_custom_call.1} parent=1 // pred_check
      _
    $region43: #{tpu_custom_call.1} parent=1 // pred_check_branch
      %231 = sbr.rel (0) target = $region45
    $region44: #{tpu_custom_call.1} parent=1 // pred_region
      %s233 = ssub.s32 256, 256
      %234 = vsyncadd [#allocation4], %s233
      %s235 = sshll.u32 [#allocation11], 4
      %s236 = int_to_ptr.vmem [resolvable:$true] %s235
      %241 = dma.vmem_to_hbm [thread:$0]  %s236, 256, %s5, [#allocation4], 128, 128, 8
    $region45: #{tpu_custom_call.1} parent=1 // pred_fallthru
      _
    // Predicated region
    $region46: #{tpu_custom_call.1} parent=1 // pred_check
      _
    $region47: #{tpu_custom_call.1} parent=1 // pred_check_branch
      %243 = sbr.rel (0) target = $region49
    $region48: #{tpu_custom_call.1} parent=1 // pred_region
      %244 = dma.done [#allocation4], 256
    $region49: #{tpu_custom_call.1} parent=1 // pred_fallthru
      _
    %245 = vsyncpa [#allocation3], 1
    %246 = vsyncpa [#allocation6], 1
    %247 = vsyncpa [#allocation9], 1
    %248 = vsyncpa [#allocation4], 1

</llo_original>
